<compile_context>
chip_gen: v5e
topology: v5e:2x2
jax: 0.10.0
libtpu: 0.0.40
codegen_flags: <defaults>
</compile_context>

<pallas_src>
import jax
import jax.numpy as jnp
from jax.experimental import pallas as pl
from jax.experimental.pallas import tpu as pltpu


def _round_up(a, m):
    return ((a + m - 1) // m) * m


# -----------------------------------------------------------------------------
# Kernels
# -----------------------------------------------------------------------------
def _linear_single_block_kernel(x_ref, w_ref, b_ref, o_ref):
    # Tiny-shape fast path: whole x / w / b / out are VMEM-resident.
    o_ref[...] = (
        jnp.dot(x_ref[...], w_ref[...], preferred_element_type=jnp.float32)
        + b_ref[...]
    ).astype(o_ref.dtype)


def _linear_tiled_f32_kernel(x_ref, w_ref, b_ref, o_ref):
    # f32 output: accumulate directly into the output block (constant block
    # index across the k axis => stays VMEM-resident), no scratch copy.
    k = pl.program_id(2)

    @pl.when(k == 0)
    def _init():
        o_ref[...] = jnp.zeros_like(o_ref)

    o_ref[...] += jnp.dot(
        x_ref[...], w_ref[...], preferred_element_type=jnp.float32
    )

    @pl.when(k == pl.num_programs(2) - 1)
    def _finalize():
        o_ref[...] += b_ref[...]


def _linear_tiled_acc_kernel(x_ref, w_ref, b_ref, o_ref, acc_ref):
    # Non-f32 output: accumulate in an f32 scratch, cast once at finalize.
    k = pl.program_id(2)

    @pl.when(k == 0)
    def _init():
        acc_ref[...] = jnp.zeros_like(acc_ref)

    acc_ref[...] += jnp.dot(
        x_ref[...], w_ref[...], preferred_element_type=jnp.float32
    )

    @pl.when(k == pl.num_programs(2) - 1)
    def _finalize():
        o_ref[...] = (acc_ref[...] + b_ref[...]).astype(o_ref.dtype)


# -----------------------------------------------------------------------------
# Wrapper
# -----------------------------------------------------------------------------
def alignment_model_forward(x, w_t, b, *, tm=256, tn=256, tk=512):
    """y = x @ w_t + b.  x: [..., K], w_t: [K, N] (= nn.Linear W.T), b: [N]."""
    *lead, K = x.shape
    x2 = x.reshape(-1, K)
    M = x2.shape[0]
    Kw, N = w_t.shape
    assert K == Kw and b.shape == (N,)
    b2 = b.reshape(1, N)
    out_dtype = x.dtype

    # ---- Tiny-shape fast path: single block, no pad / no output slice. -----
    # block_shape == full array dims is always legal (even below (8, 128)),
    # so the implied AlignmentModel shapes avoid 4-5 extra HBM round-trips.
    if M <= tm and N <= tn and K <= tk:
        out = pl.pallas_call(
            _linear_single_block_kernel,
            out_shape=jax.ShapeDtypeStruct((M, N), out_dtype),
            in_specs=[pl.BlockSpec(memory_space=pltpu.MemorySpace.VMEM)] * 3,
            out_specs=pl.BlockSpec(memory_space=pltpu.MemorySpace.VMEM),
            cost_estimate=pl.CostEstimate(
                flops=2 * M * K * N,
                bytes_accessed=x2.dtype.itemsize * (M * K + K * N + M * N + N),
                transcendentals=0,
            ),
        )(x2, w_t, b2)
        return out.reshape(*lead, N)

    # ---- Tiled path ---------------------------------------------------------
    # Lane/sublane-friendly tiles, capped at the padded problem dims so small
    # axes collapse to one block (a weight fitting a single (tk, tn) block has
    # a constant block index => DMA'd once, i.e. weight-stationary for free).
    tm = min(tm, _round_up(M, 8))
    tn = min(tn, _round_up(N, 128))
    tk = min(tk, _round_up(K, 128))

    Mp, Np, Kp = _round_up(M, tm), _round_up(N, tn), _round_up(K, tk)

    # Zero-padding of K is required for accumulation correctness.
    xp = x2 if (Mp == M and Kp == K) else jnp.pad(x2, ((0, Mp - M), (0, Kp - K)))
    wp = w_t if (Kp == K and Np == N) else jnp.pad(w_t, ((0, Kp - K), (0, Np - N)))
    bp = b2 if Np == N else jnp.pad(b2, ((0, 0), (0, Np - N)))

    grid = (Mp // tm, Np // tn, Kp // tk)

    f32_out = out_dtype == jnp.float32
    kernel = _linear_tiled_f32_kernel if f32_out else _linear_tiled_acc_kernel
    scratch = [] if f32_out else [pltpu.VMEM((tm, tn), jnp.float32)]

    # Advisory cost model reflecting the actual tiled HBM traffic:
    # x is read Np/tn times, W is read Mp/tm times.
    bytes_accessed = (
        xp.dtype.itemsize * Mp * Kp * grid[1]
        + wp.dtype.itemsize * Kp * Np * grid[0]
        + jnp.dtype(out_dtype).itemsize * Mp * Np
        + bp.dtype.itemsize * Np * grid[0]
    )

    out_padded = pl.pallas_call(
        kernel,
        out_shape=jax.ShapeDtypeStruct((Mp, Np), out_dtype),
        grid=grid,
        in_specs=[
            pl.BlockSpec((tm, tk), lambda i, j, k: (i, k)),
            pl.BlockSpec((tk, tn), lambda i, j, k: (k, j)),
            pl.BlockSpec((1, tn), lambda i, j, k: (0, j)),
        ],
        out_specs=pl.BlockSpec((tm, tn), lambda i, j, k: (i, j)),
        scratch_shapes=scratch,
        compiler_params=pltpu.CompilerParams(
            dimension_semantics=("parallel", "parallel", "arbitrary"),
        ),
        cost_estimate=pl.CostEstimate(
            flops=2 * M * K * N,
            bytes_accessed=int(bytes_accessed),
            transcendentals=0,
        ),
    )(xp, wp, bp)

    out = out_padded[:M, :N]
    return out.reshape(*lead, N)


if __name__ == "__main__":
    # Shapes implied by AlignmentModel: x is [batch, input_dim].
    batch, input_dim, output_dim = 8, 32, 16

    key = jax.random.PRNGKey(0)
    kx, kw, kb = jax.random.split(key, 3)

    x = jax.random.normal(kx, (batch, input_dim), dtype=jnp.float32)

    # Mimic nn.Linear init: U(-1/sqrt(K), 1/sqrt(K)), PyTorch layout [out, in].
    bound = 1.0 / (input_dim ** 0.5)
    w = jax.random.uniform(kw, (output_dim, input_dim), dtype=jnp.float32,
                           minval=-bound, maxval=bound)
    b = jax.random.uniform(kb, (output_dim,), dtype=jnp.float32,
                           minval=-bound, maxval=bound)

    out = jax.block_until_ready(alignment_model_forward(x, w.T, b))
    ref = jnp.dot(x, w.T, precision=jax.lax.Precision.HIGHEST) + b
    assert out.shape == (batch, output_dim)
    # Tolerance covers possible reduced-precision MXU passes for f32 operands.
    assert jnp.allclose(out, ref, atol=5e-2, rtol=5e-2), float(
        jnp.max(jnp.abs(out - ref)))

    # Secondary check: multi-tile path, grid (2, 1, 2) at tm=256/tk=512 —
    # exercises the accumulate-into-output kernel across k, padding of M/K/N,
    # and the bias broadcast at finalize.
    M2, K2, N2 = 400, 640, 200
    kx2, kw2, kb2 = jax.random.split(jax.random.PRNGKey(1), 3)
    x2 = jax.random.normal(kx2, (M2, K2), dtype=jnp.float32)
    w2 = jax.random.normal(kw2, (N2, K2), dtype=jnp.float32) * 0.05
    b2 = jax.random.normal(kb2, (N2,), dtype=jnp.float32)
    out2 = jax.block_until_ready(alignment_model_forward(x2, w2.T, b2))
    ref2 = jnp.dot(x2, w2.T, precision=jax.lax.Precision.HIGHEST) + b2
    assert out2.shape == (M2, N2)
    assert jnp.allclose(out2, ref2, atol=5e-2, rtol=5e-2), float(
        jnp.max(jnp.abs(out2 - ref2)))

    print("KERNEL_OK")
</pallas_src>

<mosaic_0001>
module attributes {stable_mosaic.version = 11 : i64} {
  func.func @_linear_single_block_kernel(%arg0: memref<8x32xf32, #tpu.memory_space<vmem>>, %arg1: memref<32x16xf32, #tpu.memory_space<vmem>>, %arg2: memref<1x16xf32, #tpu.memory_space<vmem>>, %arg3: memref<8x16xf32, #tpu.memory_space<vmem>>) attributes {dimension_semantics = [], scalar_prefetch = 0 : i64, scratch_operands = 0 : i64, tpu.core_type = #tpu.core_type<tc>} {
    %c0 = arith.constant 0 : index
    %c0_0 = arith.constant 0 : index
    %0 = vector.load %arg0[%c0, %c0_0] : memref<8x32xf32, #tpu.memory_space<vmem>>, vector<8x32xf32>
    %c0_1 = arith.constant 0 : index
    %c0_2 = arith.constant 0 : index
    %1 = vector.load %arg1[%c0_1, %c0_2] : memref<32x16xf32, #tpu.memory_space<vmem>>, vector<32x16xf32>
    %cst = arith.constant dense<0.000000e+00> : vector<8x16xf32>
    %2 = tpu.matmul %0, %1, %cst {dimension_numbers = #tpu.dot_dimension_numbers<[1], [0], [0], [1], [0, 0, 1, 1], [], []>} : vector<8x32xf32>, vector<32x16xf32>, vector<8x16xf32> -> vector<8x16xf32>
    %c0_3 = arith.constant 0 : index
    %c0_4 = arith.constant 0 : index
    %3 = vector.load %arg2[%c0_3, %c0_4] : memref<1x16xf32, #tpu.memory_space<vmem>>, vector<1x16xf32>
    %4 = vector.broadcast %3 : vector<1x16xf32> to vector<8x16xf32>
    %5 = arith.addf %2, %4 : vector<8x16xf32>
    %c0_5 = arith.constant 0 : index
    %c0_6 = arith.constant 0 : index
    %6 = vector.load %arg3[%c0_5, %c0_6] : memref<8x16xf32, #tpu.memory_space<vmem>>, vector<8x16xf32>
    tpu.vector_store %arg3[%c0_5, %c0_6], %5 {strides = array<i32>} : memref<8x16xf32, #tpu.memory_space<vmem>>, vector<8x16xf32>,
    return
  }
}

</mosaic_0001>

<llo_original>
// kernel: tpu_custom_call.1
$region0: #{tpu_custom_call.1}
  #allocation0 [shape = 'u32[]', space=smem, size = 0x4, offset = 0x4, fixed_abs, tag = 'smem constant byte address 0x4 - core index']
  #allocation1 [shape = 'u32[72,128]{1,0:T(1,128)}', space=vmem, size = 0x9000, scoped, tag = 'internal scratch']
  %s0 = inlined_call_operand.vmem [shape: f32[8,32], index: 0, kind: input, shape index: {}]
  %s1 = inlined_call_operand.vmem [shape: f32[32,16], index: 1, kind: input, shape index: {}]
  %s2 = inlined_call_operand.vmem [shape: f32[1,16], index: 2, kind: input, shape index: {}]
  %s3 = inlined_call_operand.hbm [shape: f32[8,16], index: 3, kind: output, shape index: {}]
  %s4 = sld [smem:[#allocation0]]
  $region22: #{tpu_custom_call.1} parent=0
    _
  %s6 = ssub.s32 1, %s4
  %s7 = scalar_select 0, %s6, %s4
  $region1: #{tpu_custom_call.1} parent=0
    #allocation2 [shape = 'u8[4096]{0}', space=vmem, size = 0x1000, scoped, tag = 'output window, operand 0, single buffered']
    #allocation3 [shape = 's32[1]{0}', space=sflag, size = 0x4, scoped, tag = 'scoped memory for tpu_custom_call.1']
    %8 = vsyncpa [#allocation3], 0
    // Predicated region
    $region2: #{tpu_custom_call.1} parent=1 // pred_check
      _
    $region3: #{tpu_custom_call.1} parent=1 // pred_check_branch
      %10 = sbr.rel (0) target = $region5
    $region4: #{tpu_custom_call.1} parent=1 // pred_region
      _
    $region5: #{tpu_custom_call.1} parent=1 // pred_fallthru
      _
    // Predicated region
    $region6: #{tpu_custom_call.1} parent=1 // pred_check
      _
    $region7: #{tpu_custom_call.1} parent=1 // pred_check_branch
      %12 = sbr.rel (0) target = $region9
    $region8: #{tpu_custom_call.1} parent=1 // pred_region
      _
    $region9: #{tpu_custom_call.1} parent=1 // pred_fallthru
      _
    // Predicated region
    $region10: #{tpu_custom_call.1} parent=1 // pred_check
      _
    $region11: #{tpu_custom_call.1} parent=1 // pred_check_branch
      %14 = sbr.rel (0) target = $region13
    $region12: #{tpu_custom_call.1} parent=1 // pred_region
      _
    $region13: #{tpu_custom_call.1} parent=1 // pred_fallthru
      _
    %v15 = vld [vmem:[%s0] sm:$0xff]
    %v16 = vld [vmem:[%s1] sm:$0xff]
    %v17 = vld [vmem:[%s1 + $0x8] sm:$0xff]
    %v18 = vld [vmem:[%s1 + $0x10] sm:$0xff]
    %v19 = vld [vmem:[%s1 + $0x18] sm:$0xff]
    %v20 = vld [vmem:[%s2] sm:$0x1]
    %v22 = vperm.slane %v20, 0
    %vm24 = vcmask 261120
    %v26 = vsel %vm24, %v15, 0
    %28 = vmatpush.msra.mxu0 0.0
    %29 = vmatpush.msra.mxu0 0.0
    %30 = vmatpush.msra.mxu0 0.0
    %31 = vmatpush.msra.mxu0 0.0
    %32 = vmatpush.msra.mxu0 0.0
    %33 = vmatpush.msra.mxu0 0.0
    %34 = vmatpush.msra.mxu0 0.0
    %35 = vmatpush.msra.mxu0 0.0
    %36 = vmatpush.msra.mxu0 0.0
    %37 = vmatpush.msra.mxu0 0.0
    %38 = vmatpush.msra.mxu0 0.0
    %39 = vmatpush.msra.mxu0 0.0
    %40 = vmatpush.msra.mxu0 %v19
    %41 = vmatpush.msra.mxu0 %v18
    %42 = vmatpush.msra.mxu0 %v17
    %43 = vmatpush.msra.mxu0 %v16
    %44 = vmatmul.f32.gmra.mxu0 %v26
    %v45 = vpop.f32.mrf.mxu0
    %v46 = vadd.f32 %v22, %v45
    %47 = vdwg.mxu0
    %vm48 = vcmask 130048
    %49 = vst.msk [vmem:[#allocation2] sm:$0xff] %vm48, %v46
    // Predicated region
    $region14: #{tpu_custom_call.1} parent=1 // pred_check
      _
    $region15: #{tpu_custom_call.1} parent=1 // pred_check_branch
      %51 = sbr.rel (0) target = $region17
    $region16: #{tpu_custom_call.1} parent=1 // pred_region
      %53 = vsyncadd [#allocation3], 0
      %s55 = sshll.u32 [#allocation2], 4
      %s56 = int_to_ptr.vmem [resolvable:$true] %s55
      %s57 = sshll.u32 %s3, 4
      %s58 = int_to_ptr.hbm [resolvable:$true] %s57
      %60 = dma.vmem_to_hbm [thread:$0]  %s56, 128, %s58, [#allocation3]
    $region17: #{tpu_custom_call.1} parent=1 // pred_fallthru
      _
    // Predicated region
    $region18: #{tpu_custom_call.1} parent=1 // pred_check
      _
    $region19: #{tpu_custom_call.1} parent=1 // pred_check_branch
      %62 = sbr.rel (0) target = $region21
    $region20: #{tpu_custom_call.1} parent=1 // pred_region
      %64 = dma.done [#allocation3], 128
    $region21: #{tpu_custom_call.1} parent=1 // pred_fallthru
      _
    %65 = vsyncpa [#allocation3], 1

</llo_original>
